<compile_context>
chip_gen: v7x
topology: tpu7x:2x2x1
jax: 0.10.0
libtpu: 0.0.40
codegen_flags: <defaults>
</compile_context>

<pallas_src>
import functools

import jax
import jax.numpy as jnp
from jax import lax
from jax.experimental import pallas as pl
from jax.experimental.pallas import tpu as pltpu


def _round_up(x, m):
    return ((x + m - 1) // m) * m


def _histogram_kernel(x_ref, o_ref, acc_ref, *,
                      scaled_edges, big_z, half_inv_softness, norm, n_bin,
                      B, T, tb, Tt, need_row_mask, need_col_mask):
    # x_ref: (tb, Tt) input chunk, o_ref: (tb, K), acc_ref: (tb, K) f32 scratch.
    t = pl.program_id(1)

    @pl.when(t == 0)
    def _init():
        acc_ref[...] = jnp.zeros_like(acc_ref)

    # Hoisted scaling: one multiply per element; every edge below is then a
    # single scalar-immediate subtract + one tanh (the EUP-bound inner work).
    z = x_ref[...].astype(jnp.float32) * half_inv_softness          # (tb, Tt)

    # In-kernel tail masking (replaces wrapper-side padding of x): out-of-range
    # rows/columns are driven to a sentinel large enough that every edge tanh
    # saturates to exactly 1.0, so adjacent-edge differences are exactly 0.
    if need_row_mask or need_col_mask:
        ok = None
        if need_col_mask:
            col = lax.broadcasted_iota(jnp.int32, (tb, Tt), 1)
            ok = col < (T - t * Tt)
        if need_row_mask:
            i = pl.program_id(0)
            row = lax.broadcasted_iota(jnp.int32, (tb, Tt), 0)
            rok = row < (B - i * tb)
            ok = rok if ok is None else (ok & rok)
        z = jnp.where(ok, z, big_z)

    # Edge-sharing + single-tanh formulation:
    #   sig((x-e_k)/s) - sig((x-e_{k+1})/s) = 0.5*(tanh(z-se_k) - tanh(z-se_{k+1}))
    # K+1 transcendentals per element instead of 2K sigmoids.  The previous
    # edge plane is reused (rolling SSA value, materialized in VMEM by Mosaic).
    prev = jnp.tanh(z - scaled_edges[0])
    parts = []
    for k in range(n_bin):
        cur = jnp.tanh(z - scaled_edges[k + 1])
        parts.append(jnp.sum(prev - cur, axis=-1, keepdims=True))   # (tb, 1)
        prev = cur
    # K is small (~10): one (tb, K) concat per grid step is negligible.
    # TODO(synk): for very large n_bin switch to lax.fori_loop + per-column
    # accumulation to bound vreg live ranges.
    acc_ref[...] += jnp.concatenate(parts, axis=-1)                 # (tb, K)

    @pl.when(t == pl.num_programs(1) - 1)
    def _finalize():
        acc = acc_ref[...] * 0.5          # undo the tanh/2 scale once at the end
        if norm:
            # Exact divide; tiny (tb, K) work, off the hot path.
            acc = acc / jnp.sum(acc, axis=-1, keepdims=True)
        o_ref[...] = acc.astype(o_ref.dtype)


def histogram(x, n_bin=10, lower_bound=0.0, upper_bound=1.0, norm=False,
              softness=0.001, max_tb=128, max_tt=2048):
    """Differentiable histogram (diffsptk Histogram forward).  x: (..., T) -> (..., K)."""
    assert n_bin >= 1 and lower_bound < upper_bound and softness > 0

    orig_shape = x.shape
    T = orig_shape[-1]
    x2 = x.reshape(-1, T)
    B = x2.shape[0]

    # Bin EDGES in f64 Python math (e_k = L + k*width, k = 0..K), pre-scaled by
    # 0.5/softness so the kernel sees them as compile-time scalar immediates.
    width = (float(upper_bound) - float(lower_bound)) / float(n_bin)
    half_inv = 0.5 / float(softness)
    scaled_edges = tuple((float(lower_bound) + k * width) * half_inv
                         for k in range(n_bin + 1))
    # Sentinel in scaled space: tanh(big_z - se_k) == 1.0 exactly for all k,
    # independent of softness / bounds magnitude.
    big_z = max(abs(e) for e in scaled_edges) + 30.0

    # Batch tile: multiple of 8 sublanes, <= max_tb.  Guarantee >= 2 batch
    # tiles when possible so the "parallel" axis can shard over both v7x TCs.
    tb = min(max_tb, _round_up(B, 8))
    if B > 8 and pl.cdiv(B, tb) == 1:
        tb = min(max_tb, _round_up(pl.cdiv(B, 2), 8))
    num_bt = pl.cdiv(B, tb)

    # Time chunk: full T if small, else a lane-aligned (multiple of 128) chunk.
    if T <= max_tt:
        Tt = T
    else:
        Tt = max(128, (max_tt // 128) * 128)
    num_tt = pl.cdiv(T, Tt)

    need_row_mask = (B % tb) != 0
    need_col_mask = (T % Tt) != 0

    kernel = functools.partial(
        _histogram_kernel,
        scaled_edges=scaled_edges,
        big_z=float(big_z),
        half_inv_softness=float(half_inv),
        norm=bool(norm),
        n_bin=int(n_bin),
        B=int(B), T=int(T), tb=int(tb), Tt=int(Tt),
        need_row_mask=bool(need_row_mask),
        need_col_mask=bool(need_col_mask),
    )

    itemsize = jnp.dtype(x.dtype).itemsize
    cost = pl.CostEstimate(
        flops=int((3 * n_bin + 4) * B * T),
        transcendentals=int((n_bin + 1) * B * T),
        bytes_accessed=int(B * T * itemsize + B * n_bin * itemsize),
    )

    out = pl.pallas_call(
        kernel,
        out_shape=jax.ShapeDtypeStruct((B, n_bin), x.dtype),
        grid_spec=pltpu.PrefetchScalarGridSpec(
            num_scalar_prefetch=0,
            grid=(num_bt, num_tt),
            in_specs=[pl.BlockSpec((tb, Tt), lambda i, t: (i, t))],
            out_specs=pl.BlockSpec((tb, n_bin), lambda i, t: (i, 0)),
            scratch_shapes=[pltpu.VMEM((tb, n_bin), jnp.float32)],
        ),
        compiler_params=pltpu.CompilerParams(
            dimension_semantics=("parallel", "arbitrary")),
        cost_estimate=cost,
    )(x2)

    return out.reshape(orig_shape[:-1] + (n_bin,))


def _histogram_ref(x, n_bin, lower_bound, upper_bound, norm, softness):
    """Pure-JAX reference mirroring the PyTorch module (sigmoid/center form)."""
    width = (float(upper_bound) - float(lower_bound)) / float(n_bin)
    bias = float(lower_bound) + 0.5 * width
    centers = jnp.asarray([k * width + bias for k in range(n_bin)],
                          dtype=jnp.float32)
    g = 0.5 * width
    y = x.astype(jnp.float32)[..., None, :] - centers[..., :, None]
    h = jax.nn.sigmoid((y + g) / softness) - jax.nn.sigmoid((y - g) / softness)
    h = h.sum(-1)
    if norm:
        h = h / h.sum(-1, keepdims=True)
    return h.astype(x.dtype)


if __name__ == "__main__":
    key = jax.random.PRNGKey(0)

    # Small shapes: batch=2, channels=4, seq T=16 -> x: (2, 4, 16)
    n_bin = 8
    lower_bound = -1.0
    upper_bound = 1.0
    norm = True
    softness = 0.01

    x = jax.random.uniform(key, (2, 4, 16), dtype=jnp.float32,
                           minval=-1.0, maxval=1.0)

    out = histogram(x, n_bin=n_bin, lower_bound=lower_bound,
                    upper_bound=upper_bound, norm=norm, softness=softness)
    out = jax.block_until_ready(out)

    ref = _histogram_ref(x, n_bin, lower_bound, upper_bound, norm, softness)
    assert out.shape == x.shape[:-1] + (n_bin,)
    assert jnp.allclose(out, ref, atol=1e-4, rtol=1e-4), \
        float(jnp.max(jnp.abs(out - ref)))

    print("KERNEL_OK")
</pallas_src>

<mosaic_0001>
module attributes {stable_mosaic.version = 11 : i64} {
  func.func @_histogram_kernel(%arg0: i32, %arg1: i32, %arg2: memref<8x16xf32, #tpu.memory_space<vmem>>, %arg3: memref<8x8xf32, #tpu.memory_space<vmem>>, %arg4: memref<8x8xf32, #tpu.memory_space<vmem>>) attributes {dimension_semantics = [#tpu.dimension_semantics<parallel>, #tpu.dimension_semantics<arbitrary>], iteration_bounds = array<i64: 1, 1>, scalar_prefetch = 0 : i64, scratch_operands = 1 : i64, tpu.core_type = #tpu.core_type<tc>, window_params = [{transform_indices = @transform_0, window_bounds = array<i64: 8, 16>}, {transform_indices = @transform_1, window_bounds = array<i64: 8, 8>}]} {
    %c0_i32 = arith.constant 0 : i32
    %0 = arith.cmpi eq, %arg1, %c0_i32 : i32
    %1 = arith.extui %0 : i1 to i32
    %c0_i32_0 = arith.constant 0 : i32
    %2 = arith.cmpi ne, %1, %c0_i32_0 : i32
    scf.if %2 {
      %cst_25 = arith.constant 0.000000e+00 : f32
      %64 = vector.broadcast %cst_25 : f32 to vector<8x8xf32>
      %c0_26 = arith.constant 0 : index
      %c0_27 = arith.constant 0 : index
      %65 = vector.load %arg4[%c0_26, %c0_27] : memref<8x8xf32, #tpu.memory_space<vmem>>, vector<8x8xf32>
      tpu.vector_store %arg4[%c0_26, %c0_27], %64 {strides = array<i32>} : memref<8x8xf32, #tpu.memory_space<vmem>>, vector<8x8xf32>,
    } else {
    }
    %c0 = arith.constant 0 : index
    %c0_1 = arith.constant 0 : index
    %3 = vector.load %arg2[%c0, %c0_1] : memref<8x16xf32, #tpu.memory_space<vmem>>, vector<8x16xf32>
    %cst = arith.constant 5.000000e+01 : f32
    %4 = vector.broadcast %cst : f32 to vector<8x16xf32>
    %5 = arith.mulf %3, %4 : vector<8x16xf32>
    %cst_2 = arith.constant -5.000000e+01 : f32
    %6 = vector.broadcast %cst_2 : f32 to vector<8x16xf32>
    %7 = arith.subf %5, %6 : vector<8x16xf32>
    %8 = math.tanh %7 : vector<8x16xf32>
    %cst_3 = arith.constant -3.750000e+01 : f32
    %9 = vector.broadcast %cst_3 : f32 to vector<8x16xf32>
    %10 = arith.subf %5, %9 : vector<8x16xf32>
    %11 = math.tanh %10 : vector<8x16xf32>
    %12 = arith.subf %8, %11 : vector<8x16xf32>
    %cst_4 = arith.constant dense<0.000000e+00> : vector<8xf32>
    %13 = vector.multi_reduction <add>, %12, %cst_4 [1] : vector<8x16xf32> to vector<8xf32>
    %14 = vector.shape_cast %13 : vector<8xf32> to vector<8x1xf32>
    %cst_5 = arith.constant -2.500000e+01 : f32
    %15 = vector.broadcast %cst_5 : f32 to vector<8x16xf32>
    %16 = arith.subf %5, %15 : vector<8x16xf32>
    %17 = math.tanh %16 : vector<8x16xf32>
    %18 = arith.subf %11, %17 : vector<8x16xf32>
    %cst_6 = arith.constant dense<0.000000e+00> : vector<8xf32>
    %19 = vector.multi_reduction <add>, %18, %cst_6 [1] : vector<8x16xf32> to vector<8xf32>
    %20 = vector.shape_cast %19 : vector<8xf32> to vector<8x1xf32>
    %cst_7 = arith.constant -1.250000e+01 : f32
    %21 = vector.broadcast %cst_7 : f32 to vector<8x16xf32>
    %22 = arith.subf %5, %21 : vector<8x16xf32>
    %23 = math.tanh %22 : vector<8x16xf32>
    %24 = arith.subf %17, %23 : vector<8x16xf32>
    %cst_8 = arith.constant dense<0.000000e+00> : vector<8xf32>
    %25 = vector.multi_reduction <add>, %24, %cst_8 [1] : vector<8x16xf32> to vector<8xf32>
    %26 = vector.shape_cast %25 : vector<8xf32> to vector<8x1xf32>
    %cst_9 = arith.constant 0.000000e+00 : f32
    %27 = vector.broadcast %cst_9 : f32 to vector<8x16xf32>
    %28 = arith.subf %5, %27 : vector<8x16xf32>
    %29 = math.tanh %28 : vector<8x16xf32>
    %30 = arith.subf %23, %29 : vector<8x16xf32>
    %cst_10 = arith.constant dense<0.000000e+00> : vector<8xf32>
    %31 = vector.multi_reduction <add>, %30, %cst_10 [1] : vector<8x16xf32> to vector<8xf32>
    %32 = vector.shape_cast %31 : vector<8xf32> to vector<8x1xf32>
    %cst_11 = arith.constant 1.250000e+01 : f32
    %33 = vector.broadcast %cst_11 : f32 to vector<8x16xf32>
    %34 = arith.subf %5, %33 : vector<8x16xf32>
    %35 = math.tanh %34 : vector<8x16xf32>
    %36 = arith.subf %29, %35 : vector<8x16xf32>
    %cst_12 = arith.constant dense<0.000000e+00> : vector<8xf32>
    %37 = vector.multi_reduction <add>, %36, %cst_12 [1] : vector<8x16xf32> to vector<8xf32>
    %38 = vector.shape_cast %37 : vector<8xf32> to vector<8x1xf32>
    %cst_13 = arith.constant 2.500000e+01 : f32
    %39 = vector.broadcast %cst_13 : f32 to vector<8x16xf32>
    %40 = arith.subf %5, %39 : vector<8x16xf32>
    %41 = math.tanh %40 : vector<8x16xf32>
    %42 = arith.subf %35, %41 : vector<8x16xf32>
    %cst_14 = arith.constant dense<0.000000e+00> : vector<8xf32>
    %43 = vector.multi_reduction <add>, %42, %cst_14 [1] : vector<8x16xf32> to vector<8xf32>
    %44 = vector.shape_cast %43 : vector<8xf32> to vector<8x1xf32>
    %cst_15 = arith.constant 3.750000e+01 : f32
    %45 = vector.broadcast %cst_15 : f32 to vector<8x16xf32>
    %46 = arith.subf %5, %45 : vector<8x16xf32>
    %47 = math.tanh %46 : vector<8x16xf32>
    %48 = arith.subf %41, %47 : vector<8x16xf32>
    %cst_16 = arith.constant dense<0.000000e+00> : vector<8xf32>
    %49 = vector.multi_reduction <add>, %48, %cst_16 [1] : vector<8x16xf32> to vector<8xf32>
    %50 = vector.shape_cast %49 : vector<8xf32> to vector<8x1xf32>
    %cst_17 = arith.constant 5.000000e+01 : f32
    %51 = vector.broadcast %cst_17 : f32 to vector<8x16xf32>
    %52 = arith.subf %5, %51 : vector<8x16xf32>
    %53 = math.tanh %52 : vector<8x16xf32>
    %54 = arith.subf %47, %53 : vector<8x16xf32>
    %cst_18 = arith.constant dense<0.000000e+00> : vector<8xf32>
    %55 = vector.multi_reduction <add>, %54, %cst_18 [1] : vector<8x16xf32> to vector<8xf32>
    %56 = vector.shape_cast %55 : vector<8xf32> to vector<8x1xf32>
    %c0_19 = arith.constant 0 : index
    %c0_20 = arith.constant 0 : index
    %57 = vector.load %arg4[%c0_19, %c0_20] : memref<8x8xf32, #tpu.memory_space<vmem>>, vector<8x8xf32>
    %58 = tpu.concatenate %14, %20, %26, %32, %38, %44, %50, %56 in 1 : vector<8x1xf32>, vector<8x1xf32>, vector<8x1xf32>, vector<8x1xf32>, vector<8x1xf32>, vector<8x1xf32>, vector<8x1xf32>, vector<8x1xf32> -> vector<8x8xf32>
    %59 = arith.addf %57, %58 : vector<8x8xf32>
    %c0_21 = arith.constant 0 : index
    %c0_22 = arith.constant 0 : index
    %60 = vector.load %arg4[%c0_21, %c0_22] : memref<8x8xf32, #tpu.memory_space<vmem>>, vector<8x8xf32>
    tpu.vector_store %arg4[%c0_21, %c0_22], %59 {strides = array<i32>} : memref<8x8xf32, #tpu.memory_space<vmem>>, vector<8x8xf32>,
    %c0_i32_23 = arith.constant 0 : i32
    %61 = arith.cmpi eq, %arg1, %c0_i32_23 : i32
    %62 = arith.extui %61 : i1 to i32
    %c0_i32_24 = arith.constant 0 : i32
    %63 = arith.cmpi ne, %62, %c0_i32_24 : i32
    scf.if %63 {
      %c0_25 = arith.constant 0 : index
      %c0_26 = arith.constant 0 : index
      %64 = vector.load %arg4[%c0_25, %c0_26] : memref<8x8xf32, #tpu.memory_space<vmem>>, vector<8x8xf32>
      %cst_27 = arith.constant 5.000000e-01 : f32
      %65 = vector.broadcast %cst_27 : f32 to vector<8x8xf32>
      %66 = arith.mulf %64, %65 : vector<8x8xf32>
      %cst_28 = arith.constant dense<0.000000e+00> : vector<8xf32>
      %67 = vector.multi_reduction <add>, %66, %cst_28 [1] : vector<8x8xf32> to vector<8xf32>
      %68 = vector.shape_cast %67 : vector<8xf32> to vector<8x1xf32>
      %69 = vector.broadcast %68 : vector<8x1xf32> to vector<8x8xf32>
      %70 = arith.divf %66, %69 : vector<8x8xf32>
      %c0_29 = arith.constant 0 : index
      %c0_30 = arith.constant 0 : index
      %71 = vector.load %arg3[%c0_29, %c0_30] : memref<8x8xf32, #tpu.memory_space<vmem>>, vector<8x8xf32>
      tpu.vector_store %arg3[%c0_29, %c0_30], %70 {strides = array<i32>} : memref<8x8xf32, #tpu.memory_space<vmem>>, vector<8x8xf32>,
    } else {
    }
    return
  }
  func.func @transform_0(%arg0: i32, %arg1: i32) -> (i32, i32) {
    %c0_i32 = arith.constant 0 : i32
    return %arg0, %arg1 : i32, i32
  }
  func.func @transform_1(%arg0: i32, %arg1: i32) -> (i32, i32) {
    %c0_i32 = arith.constant 0 : i32
    %c0_i32_0 = arith.constant 0 : i32
    return %arg0, %c0_i32 : i32, i32
  }
}

</mosaic_0001>

<llo_original>
// kernel: tpu_custom_call.1
$region0: #{tpu_custom_call.1}
  #allocation0 [shape = 'u32[]', space=smem, size = 0x4, offset = 0x4, fixed_abs, tag = 'smem constant byte address 0x4 - core index']
  #allocation1 [shape = 'u32[144,128]{1,0:T(1,128)}', space=vmem, size = 0x12000, scoped, tag = 'internal scratch']
  #allocation2 [shape = 'f32[8,8]{1,0:T(8,128)}', space=vmem, size = 0x1000, scoped, tag = 'scratch operand']
  %s0 = inlined_call_operand.hbm [shape: f32[8,16], index: 0, kind: input, shape index: {}]
  %s1 = inlined_call_operand.hbm [shape: f32[8,8], index: 1, kind: output, shape index: {}]
  %s2 = sld [smem:[#allocation0]]
  $region26: #{tpu_custom_call.1} parent=0
    _
  %s4 = ssub.s32 1, %s2
  %s5 = scalar_select 0, %s4, %s2
  $region1: #{tpu_custom_call.1} parent=0
    #allocation3 [shape = 'u8[4096]{0}', space=vmem, size = 0x1000, scoped, tag = 'input window, operand 0, single buffered']
    #allocation4 [shape = 's32[1]{0}', space=sflag, size = 0x4, scoped, tag = 'scoped memory for tpu_custom_call.1']
    #allocation5 [shape = 's32[1]{0}', space=sflag, size = 0x4, scoped, tag = 'scoped memory for tpu_custom_call.1']
    #allocation6 [shape = 'u8[4096]{0}', space=vmem, size = 0x1000, scoped, tag = 'output window, operand 0, single buffered']
    %6 = vsyncpa [#allocation4], 0
    %7 = vsyncpa [#allocation5], 0
    // Predicated region
    $region2: #{tpu_custom_call.1} parent=1 // pred_check
      _
    $region3: #{tpu_custom_call.1} parent=1 // pred_check_branch
      %9 = sbr.rel (0) target = $region5
    $region4: #{tpu_custom_call.1} parent=1 // pred_region
      %s11 = ssub.s32 128, 128
      %12 = vsyncadd [#allocation4], %s11
      %s14 = sshll.u32 [#allocation3], 4
      %s15 = int_to_ptr.vmem [resolvable:$true] %s14
      %17 = dma.hbm_to_vmem [thread:$0]  %s0, 128, %s15, [#allocation4]
    $region5: #{tpu_custom_call.1} parent=1 // pred_fallthru
      _
    // Predicated region
    $region6: #{tpu_custom_call.1} parent=1 // pred_check
      _
    $region7: #{tpu_custom_call.1} parent=1 // pred_check_branch
      %19 = sbr.rel (0) target = $region9
    $region8: #{tpu_custom_call.1} parent=1 // pred_region
      %20 = dma.done [#allocation4], 128
    $region9: #{tpu_custom_call.1} parent=1 // pred_fallthru
      _
    %p21 = scmp.eq.s32.totalorder 0, 0
    // Predicated region
    $region10: #{tpu_custom_call.1} parent=1 // pred_check
      %p22 = pneg %p21
    $region11: #{tpu_custom_call.1} parent=1 // pred_check_branch
      %24 = sbr.rel (%p22) target = $region13
    $region12: #{tpu_custom_call.1} parent=1 // pred_region
      %vm25 = vcmask 64512
      %26 = vst.msk [vmem:[#allocation2] sm:$0xff] %vm25, 0.0
    $region13: #{tpu_custom_call.1} parent=1 // pred_fallthru
      _
    %v27 = vld [vmem:[#allocation3] sm:$0xff]
    %v28 = vmul.f32 %v27, 50.0
    %v29 = vsub.f32 %v28, -50.0
    %v30 = vtanh.pop %v29
    %v31 = vsub.f32 %v28, -37.5
    %v32 = vtanh.pop %v31
    %v33 = vsub.f32 %v30, %v32
    %vm34 = vcmask 130048
    %v35 = vsel %vm34, %v33, 0.0
    %36 = vadd.xlane.f32.xlu0 %v35
    %v37 = vpop.xlane.xlu0 %36
    %v38 = vsub.f32 %v28, -25.0
    %v39 = vtanh.pop %v38
    %v40 = vsub.f32 %v32, %v39
    %v41 = vsel %vm34, %v40, 0.0
    %42 = vadd.xlane.f32.xlu0 %v41
    %v43 = vpop.xlane.xlu0 %42
    %v44 = vsub.f32 %v28, -12.5
    %v45 = vtanh.pop %v44
    %v46 = vsub.f32 %v39, %v45
    %v47 = vsel %vm34, %v46, 0.0
    %48 = vadd.xlane.f32.xlu0 %v47
    %v49 = vpop.xlane.xlu0 %48
    %v50 = vtanh.pop %v28
    %v51 = vsub.f32 %v45, %v50
    %v52 = vsel %vm34, %v51, 0.0
    %53 = vadd.xlane.f32.xlu0 %v52
    %v54 = vpop.xlane.xlu0 %53
    %v55 = vsub.f32 %v28, 12.5
    %v56 = vtanh.pop %v55
    %v57 = vsub.f32 %v50, %v56
    %v58 = vsel %vm34, %v57, 0.0
    %59 = vadd.xlane.f32.xlu0 %v58
    %v60 = vpop.xlane.xlu0 %59
    %v61 = vsub.f32 %v28, 25.0
    %v62 = vtanh.pop %v61
    %v63 = vsub.f32 %v56, %v62
    %v64 = vsel %vm34, %v63, 0.0
    %65 = vadd.xlane.f32.xlu0 %v64
    %v66 = vpop.xlane.xlu0 %65
    %v67 = vsub.f32 %v28, 37.5
    %v68 = vtanh.pop %v67
    %v69 = vsub.f32 %v62, %v68
    %v70 = vsel %vm34, %v69, 0.0
    %71 = vadd.xlane.f32.xlu0 %v70
    %v72 = vpop.xlane.xlu0 %71
    %v73 = vsub.f32 %v28, 50.0
    %v74 = vtanh.pop %v73
    %v75 = vsub.f32 %v68, %v74
    %v76 = vsel %vm34, %v75, 0.0
    %77 = vadd.xlane.f32.xlu0 %v76
    %v78 = vpop.xlane.xlu0 %77
    %v79 = vld [vmem:[#allocation2] sm:$0xff]
    %vm80 = vcmask 7168
    %v81 = vsel %vm80, %v37, %v43
    %vm82 = vcmask 15360
    %v83 = vsel %vm82, %v81, %v49
    %vm84 = vcmask 23552
    %v85 = vsel %vm84, %v83, %v54
    %vm86 = vcmask 31744
    %v87 = vsel %vm86, %v85, %v60
    %vm88 = vcmask 39936
    %v89 = vsel %vm88, %v87, %v66
    %vm90 = vcmask 48128
    %v91 = vsel %vm90, %v89, %v72
    %vm92 = vcmask 56320
    %v93 = vsel %vm92, %v91, %v78
    %v94 = vadd.f32 %v79, %v93
    %vm95 = vcmask 64512
    %96 = vst.msk [vmem:[#allocation2] sm:$0xff] %vm95, %v94
    // Predicated region
    $region14: #{tpu_custom_call.1} parent=1 // pred_check
      %p97 = pneg %p21
    $region15: #{tpu_custom_call.1} parent=1 // pred_check_branch
      %99 = sbr.rel (%p97) target = $region17
    $region16: #{tpu_custom_call.1} parent=1 // pred_region
      %v100 = vld [vmem:[#allocation2] sm:$0xff]
      %v101 = vmul.f32 %v100, 0.5
      %v102 = vsel %vm95, %v101, 0.0
      %103 = vadd.xlane.f32.xlu0 %v102
      %v104 = vpop.xlane.xlu0 %103
      %v105 = vrcp.pop %v104
      %v106 = vmul.f32 %v101, %v105
      %107 = vst.msk [vmem:[#allocation6] sm:$0xff] %vm95, %v106
    $region17: #{tpu_custom_call.1} parent=1 // pred_fallthru
      _
    // Predicated region
    $region18: #{tpu_custom_call.1} parent=1 // pred_check
      _
    $region19: #{tpu_custom_call.1} parent=1 // pred_check_branch
      %109 = sbr.rel (0) target = $region21
    $region20: #{tpu_custom_call.1} parent=1 // pred_region
      %s111 = ssub.s32 128, 128
      %112 = vsyncadd [#allocation5], %s111
      %s114 = sshll.u32 [#allocation6], 4
      %s115 = int_to_ptr.vmem [resolvable:$true] %s114
      %117 = dma.vmem_to_hbm [thread:$0]  %s115, 128, %s1, [#allocation5]
    $region21: #{tpu_custom_call.1} parent=1 // pred_fallthru
      _
    // Predicated region
    $region22: #{tpu_custom_call.1} parent=1 // pred_check
      _
    $region23: #{tpu_custom_call.1} parent=1 // pred_check_branch
      %119 = sbr.rel (0) target = $region25
    $region24: #{tpu_custom_call.1} parent=1 // pred_region
      %120 = dma.done [#allocation5], 128
    $region25: #{tpu_custom_call.1} parent=1 // pred_fallthru
      _
    %121 = vsyncpa [#allocation4], 1
    %122 = vsyncpa [#allocation5], 1

</llo_original>
